<compile_context>
chip_gen: v7x
topology: tpu7x:2x2x1
jax: 0.10.0
libtpu: 0.0.40
codegen_flags: <defaults>
</compile_context>

<pallas_src>
import functools

import jax
import jax.numpy as jnp
from jax.experimental import pallas as pl
from jax.experimental.pallas import tpu as pltpu

BN_EPS = 1e-5


def _head_kernel(x_ref, scale_ref, shift_ref, gfeat_ref, feat_ref, acc_ref,
                 *, inv_hw, lane_chunk):
    # x_ref: (b_blk, c_blk, hw_blk) block — channels on sublanes, spatial on lanes.
    k = pl.program_id(2)

    @pl.when(k == 0)
    def _init():
        acc_ref[...] = jnp.zeros_like(acc_ref)

    hw_blk = x_ref.shape[-1]
    if lane_chunk is not None:
        # Two-stage reduce: accumulate lane-aligned 128-wide slices with pure
        # VPU elementwise adds (only the current slice is up-cast to f32, never
        # the whole block), then one amortized XLU lane-reduce per step.
        n_chunks = hw_blk // lane_chunk
        partial = x_ref[:, :, 0:lane_chunk].astype(jnp.float32)
        for j in range(1, n_chunks):
            partial = partial + x_ref[
                :, :, j * lane_chunk:(j + 1) * lane_chunk].astype(jnp.float32)
        acc_ref[...] += jnp.sum(partial, axis=-1)
    else:
        # Small / non-128-multiple HW: single f32-accumulated lane reduce.
        acc_ref[...] += jnp.sum(x_ref[...], axis=-1, dtype=jnp.float32)

    @pl.when(k == pl.num_programs(2) - 1)
    def _finalize():
        # Global average pool (AdaptiveAvgPool2d(1) + view).
        pooled = acc_ref[...] * inv_hw                        # (b_blk, c_blk) f32
        gfeat_ref[...] = pooled.astype(gfeat_ref.dtype)
        # Eval-mode BatchNorm1d folded to one FMA: feat = pooled*scale + shift.
        feat_ref[...] = (pooled * scale_ref[...] + shift_ref[...]).astype(feat_ref.dtype)


def baseline_hr_head(x_nchw, gamma, beta, running_mean, running_var, eps=BN_EPS):
    """x_nchw: [B, C, H, W] backbone output. Returns (global_feat, feat), each [B, C] f32."""
    B, C, H, W = x_nchw.shape
    HW = H * W

    # Free contiguous reshape (no HBM transpose copy): [B, C, HW].
    x = x_nchw.reshape(B, C, HW)

    # Fold eval-mode BN into scale/shift once (batch-independent, plain JAX).
    inv_std = jax.lax.rsqrt(running_var.astype(jnp.float32) + eps)
    scale_v = gamma.astype(jnp.float32) * inv_std                          # (C,)
    shift_v = beta.astype(jnp.float32) - running_mean.astype(jnp.float32) * scale_v
    scale = scale_v.reshape(1, C)
    shift = shift_v.reshape(1, C)

    itemsize = jnp.dtype(x.dtype).itemsize

    # ---- Block sizing -------------------------------------------------------
    # Per-block x budget: ~4 MiB (double-buffered -> 8 MiB, plus the small f32
    # reduction staging) fits v5e's 16 MiB default scoped VMEM and is trivially
    # within v7x's 64 MiB physical VMEM.
    max_x_block_bytes = 4 * 1024 * 1024

    # Batch block: 8 sublanes (unmasked output stores) when B divides evenly,
    # otherwise the whole batch in one block (full-dim blocks are always legal).
    b_blk = 8 if (B >= 8 and B % 8 == 0) else B
    n_b_blocks = B // b_blk

    # Channel block: lane-dense (multiple of 128). When the batch gives only a
    # single block, force >= 2 channel blocks so both v7x TensorCores get work.
    if C % 128 == 0 and C > 128:
        c_blk = 128
        for cand in (512, 256):
            if (C % cand == 0
                    and (n_b_blocks >= 2 or C // cand >= 2)
                    and b_blk * cand * 128 * itemsize <= max_x_block_bytes):
                c_blk = cand
                break
    else:
        c_blk = C
    n_c_blocks = C // c_blk

    # HW block: a multiple of 128 lanes that divides HW and keeps one input
    # block under the budget; the HW axis becomes an "arbitrary" reduction axis.
    if HW % 128 == 0:
        lane_chunk = 128
        per_128_bytes = b_blk * c_blk * 128 * itemsize
        max_d = max(1, max_x_block_bytes // per_128_bytes)
        n128 = HW // 128
        d = 1
        for cand_d in range(1, min(n128, max_d) + 1):
            if n128 % cand_d == 0:
                d = cand_d
        hw_blk = d * 128
    else:
        # TODO(synk): for HW not a multiple of 128 (e.g. 7x7 ResNet heads), fold
        #             a channel factor into the lane axis to restore lane-dense DMA.
        lane_chunk = None
        hw_blk = HW
    n_k_blocks = HW // hw_blk

    grid = (n_b_blocks, n_c_blocks, n_k_blocks)

    cost = pl.CostEstimate(
        flops=B * C * HW + 3 * B * C,
        transcendentals=0,
        bytes_accessed=B * C * HW * itemsize + 2 * C * 4 + 2 * B * C * 4,
    )

    # Params indexed only by the channel axis: with k innermost they are only
    # re-fetched when the channel block changes (effectively resident).
    param_spec = pl.BlockSpec((1, c_blk), lambda b, c, k: (0, c))
    out_spec = pl.BlockSpec((b_blk, c_blk), lambda b, c, k: (b, c))

    gfeat, feat = pl.pallas_call(
        functools.partial(_head_kernel, inv_hw=1.0 / HW, lane_chunk=lane_chunk),
        out_shape=(
            jax.ShapeDtypeStruct((B, C), jnp.float32),
            jax.ShapeDtypeStruct((B, C), jnp.float32),
        ),
        grid_spec=pltpu.PrefetchScalarGridSpec(
            num_scalar_prefetch=0,
            grid=grid,
            in_specs=[
                pl.BlockSpec((b_blk, c_blk, hw_blk), lambda b, c, k: (b, c, k)),
                param_spec,
                param_spec,
            ],
            out_specs=[out_spec, out_spec],
            scratch_shapes=[pltpu.VMEM((b_blk, c_blk), jnp.float32)],
        ),
        compiler_params=pltpu.CompilerParams(
            dimension_semantics=("parallel", "parallel", "arbitrary"),
            vmem_limit_bytes=32 * 1024 * 1024,
        ),
        cost_estimate=cost,
    )(x, scale, shift)
    return gfeat, feat


if __name__ == "__main__":
    # Small shapes consistent with the module's head: backbone output
    # [B, in_planes, H, W].  Reduced in_planes for the synthetic test.
    B, C, H, W = 2, 128, 16, 16

    key = jax.random.PRNGKey(0)
    x = jax.random.normal(key, (B, C, H, W), dtype=jnp.float32)

    # Deterministic BN-neck parameter init, matching weights_init_kaiming for
    # BatchNorm (weight=1, bias=0) and PyTorch BatchNorm1d default buffers.
    gamma = jnp.ones((C,), jnp.float32)
    beta = jnp.zeros((C,), jnp.float32)          # bias frozen at 0
    running_mean = jnp.zeros((C,), jnp.float32)
    running_var = jnp.ones((C,), jnp.float32)

    global_feat, feat = baseline_hr_head(x, gamma, beta, running_mean, running_var)
    jax.block_until_ready((global_feat, feat))

    # Reference check (plain JAX) for the head semantics.
    ref_gfeat = jnp.mean(x.astype(jnp.float32), axis=(2, 3))
    ref_feat = (ref_gfeat - running_mean) / jnp.sqrt(running_var + BN_EPS) * gamma + beta
    assert jnp.allclose(global_feat, ref_gfeat, atol=1e-5, rtol=1e-5)
    assert jnp.allclose(feat, ref_feat, atol=1e-5, rtol=1e-5)

    # Eval + neck_feat == 'after' -> returns `feat`; otherwise `global_feat`;
    # training returns both.  All are computed above.
    print("KERNEL_OK")
</pallas_src>

<mosaic_0001>
module attributes {stable_mosaic.version = 11 : i64} {
  func.func @_head_kernel(%arg0: i32, %arg1: i32, %arg2: i32, %arg3: memref<2x128x256xf32, #tpu.memory_space<vmem>>, %arg4: memref<1x128xf32, #tpu.memory_space<vmem>>, %arg5: memref<1x128xf32, #tpu.memory_space<vmem>>, %arg6: memref<2x128xf32, #tpu.memory_space<vmem>>, %arg7: memref<2x128xf32, #tpu.memory_space<vmem>>, %arg8: memref<2x128xf32, #tpu.memory_space<vmem>>) attributes {dimension_semantics = [#tpu.dimension_semantics<parallel>, #tpu.dimension_semantics<parallel>, #tpu.dimension_semantics<arbitrary>], iteration_bounds = array<i64: 1, 1, 1>, scalar_prefetch = 0 : i64, scratch_operands = 1 : i64, tpu.core_type = #tpu.core_type<tc>, window_params = [{transform_indices = @transform_0, window_bounds = array<i64: 2, 128, 256>}, {transform_indices = @transform_1, window_bounds = array<i64: 1, 128>}, {transform_indices = @transform_2, window_bounds = array<i64: 1, 128>}, {transform_indices = @transform_3, window_bounds = array<i64: 2, 128>}, {transform_indices = @transform_4, window_bounds = array<i64: 2, 128>}]} {
    %c0_i32 = arith.constant 0 : i32
    %0 = arith.cmpi eq, %arg2, %c0_i32 : i32
    %1 = arith.extui %0 : i1 to i32
    %c0_i32_0 = arith.constant 0 : i32
    %2 = arith.cmpi ne, %1, %c0_i32_0 : i32
    scf.if %2 {
      %cst_11 = arith.constant 0.000000e+00 : f32
      %13 = vector.broadcast %cst_11 : f32 to vector<2x128xf32>
      %c0_12 = arith.constant 0 : index
      %c0_13 = arith.constant 0 : index
      %14 = vector.load %arg8[%c0_12, %c0_13] : memref<2x128xf32, #tpu.memory_space<vmem>>, vector<2x128xf32>
      tpu.vector_store %arg8[%c0_12, %c0_13], %13 {strides = array<i32>} : memref<2x128xf32, #tpu.memory_space<vmem>>, vector<2x128xf32>,
    } else {
    }
    %c0 = arith.constant 0 : index
    %c0_1 = arith.constant 0 : index
    %c0_2 = arith.constant 0 : index
    %3 = vector.load %arg3[%c0, %c0_1, %c0_2] : memref<2x128x256xf32, #tpu.memory_space<vmem>>, vector<2x128x128xf32>
    %c0_3 = arith.constant 0 : index
    %c0_4 = arith.constant 0 : index
    %c128 = arith.constant 128 : index
    %4 = vector.load %arg3[%c0_3, %c0_4, %c128] : memref<2x128x256xf32, #tpu.memory_space<vmem>>, vector<2x128x128xf32>
    %5 = arith.addf %3, %4 : vector<2x128x128xf32>
    %c0_5 = arith.constant 0 : index
    %c0_6 = arith.constant 0 : index
    %6 = vector.load %arg8[%c0_5, %c0_6] : memref<2x128xf32, #tpu.memory_space<vmem>>, vector<2x128xf32>
    %cst = arith.constant dense<0.000000e+00> : vector<2x128xf32>
    %7 = vector.multi_reduction <add>, %5, %cst [2] : vector<2x128x128xf32> to vector<2x128xf32>
    %8 = arith.addf %6, %7 : vector<2x128xf32>
    %c0_7 = arith.constant 0 : index
    %c0_8 = arith.constant 0 : index
    %9 = vector.load %arg8[%c0_7, %c0_8] : memref<2x128xf32, #tpu.memory_space<vmem>>, vector<2x128xf32>
    tpu.vector_store %arg8[%c0_7, %c0_8], %8 {strides = array<i32>} : memref<2x128xf32, #tpu.memory_space<vmem>>, vector<2x128xf32>,
    %c0_i32_9 = arith.constant 0 : i32
    %10 = arith.cmpi eq, %arg2, %c0_i32_9 : i32
    %11 = arith.extui %10 : i1 to i32
    %c0_i32_10 = arith.constant 0 : i32
    %12 = arith.cmpi ne, %11, %c0_i32_10 : i32
    scf.if %12 {
      %c0_11 = arith.constant 0 : index
      %c0_12 = arith.constant 0 : index
      %13 = vector.load %arg8[%c0_11, %c0_12] : memref<2x128xf32, #tpu.memory_space<vmem>>, vector<2x128xf32>
      %cst_13 = arith.constant 3.906250e-03 : f32
      %14 = vector.broadcast %cst_13 : f32 to vector<2x128xf32>
      %15 = arith.mulf %13, %14 : vector<2x128xf32>
      %c0_14 = arith.constant 0 : index
      %c0_15 = arith.constant 0 : index
      %16 = vector.load %arg6[%c0_14, %c0_15] : memref<2x128xf32, #tpu.memory_space<vmem>>, vector<2x128xf32>
      tpu.vector_store %arg6[%c0_14, %c0_15], %15 {strides = array<i32>} : memref<2x128xf32, #tpu.memory_space<vmem>>, vector<2x128xf32>,
      %c0_16 = arith.constant 0 : index
      %c0_17 = arith.constant 0 : index
      %17 = vector.load %arg4[%c0_16, %c0_17] : memref<1x128xf32, #tpu.memory_space<vmem>>, vector<1x128xf32>
      %18 = vector.broadcast %17 : vector<1x128xf32> to vector<2x128xf32>
      %19 = arith.mulf %15, %18 : vector<2x128xf32>
      %c0_18 = arith.constant 0 : index
      %c0_19 = arith.constant 0 : index
      %20 = vector.load %arg5[%c0_18, %c0_19] : memref<1x128xf32, #tpu.memory_space<vmem>>, vector<1x128xf32>
      %21 = vector.broadcast %20 : vector<1x128xf32> to vector<2x128xf32>
      %22 = arith.addf %19, %21 : vector<2x128xf32>
      %c0_20 = arith.constant 0 : index
      %c0_21 = arith.constant 0 : index
      %23 = vector.load %arg7[%c0_20, %c0_21] : memref<2x128xf32, #tpu.memory_space<vmem>>, vector<2x128xf32>
      tpu.vector_store %arg7[%c0_20, %c0_21], %22 {strides = array<i32>} : memref<2x128xf32, #tpu.memory_space<vmem>>, vector<2x128xf32>,
    } else {
    }
    return
  }
  func.func @transform_0(%arg0: i32, %arg1: i32, %arg2: i32) -> (i32, i32, i32) {
    %c0_i32 = arith.constant 0 : i32
    return %arg0, %arg1, %arg2 : i32, i32, i32
  }
  func.func @transform_1(%arg0: i32, %arg1: i32, %arg2: i32) -> (i32, i32) {
    %c0_i32 = arith.constant 0 : i32
    %c0_i32_0 = arith.constant 0 : i32
    return %c0_i32, %arg1 : i32, i32
  }
  func.func @transform_2(%arg0: i32, %arg1: i32, %arg2: i32) -> (i32, i32) {
    %c0_i32 = arith.constant 0 : i32
    %c0_i32_0 = arith.constant 0 : i32
    return %c0_i32, %arg1 : i32, i32
  }
  func.func @transform_3(%arg0: i32, %arg1: i32, %arg2: i32) -> (i32, i32) {
    %c0_i32 = arith.constant 0 : i32
    return %arg0, %arg1 : i32, i32
  }
  func.func @transform_4(%arg0: i32, %arg1: i32, %arg2: i32) -> (i32, i32) {
    %c0_i32 = arith.constant 0 : i32
    return %arg0, %arg1 : i32, i32
  }
}

</mosaic_0001>

<llo_original>
// kernel: tpu_custom_call.1
$region0: #{tpu_custom_call.1}
  #allocation0 [shape = 'u32[]', space=smem, size = 0x4, offset = 0x4, fixed_abs, tag = 'smem constant byte address 0x4 - core index']
  #allocation1 [shape = 'u32[144,128]{1,0:T(1,128)}', space=vmem, size = 0x12000, scoped, tag = 'internal scratch']
  #allocation2 [shape = 'f32[2,128]{1,0:T(2,128)}', space=vmem, size = 0x400, scoped, tag = 'scratch operand']
  %s0 = inlined_call_operand.hbm [shape: f32[2,128,256], index: 0, kind: input, shape index: {}]
  %s1 = inlined_call_operand.vmem [shape: f32[1,128], index: 1, kind: input, shape index: {}]
  %s2 = inlined_call_operand.vmem [shape: f32[1,128], index: 2, kind: input, shape index: {}]
  %s3 = inlined_call_operand.hbm [shape: f32[2,128], index: 3, kind: output, shape index: {0}]
  %s4 = inlined_call_operand.hbm [shape: f32[2,128], index: 4, kind: output, shape index: {1}]
  %5 = xla_tuple %s3, %s4
  %s6 = sld [smem:[#allocation0]]
  $region42: #{tpu_custom_call.1} parent=0
    _
  %s8 = ssub.s32 1, %s6
  %s9 = scalar_select 0, %s8, %s6
  $region1: #{tpu_custom_call.1} parent=0
    #allocation3 [shape = 'u8[262144]{0}', space=vmem, size = 0x40000, scoped, tag = 'input window, operand 0, single buffered']
    #allocation4 [shape = 's32[1]{0}', space=sflag, size = 0x4, scoped, tag = 'scoped memory for tpu_custom_call.1']
    #allocation5 [shape = 's32[1]{0}', space=sflag, size = 0x4, scoped, tag = 'scoped memory for tpu_custom_call.1']
    #allocation6 [shape = 'u8[1024]{0}', space=vmem, size = 0x400, scoped, tag = 'output window, operand 0, single buffered']
    #allocation7 [shape = 'u8[1024]{0}', space=vmem, size = 0x400, scoped, tag = 'output window, operand 1, single buffered']
    #allocation8 [shape = 's32[1]{0}', space=sflag, size = 0x4, scoped, tag = 'scoped memory for tpu_custom_call.1']
    %10 = vsyncpa [#allocation4], 0
    %11 = vsyncpa [#allocation5], 0
    %12 = vsyncpa [#allocation8], 0
    // Predicated region
    $region2: #{tpu_custom_call.1} parent=1 // pred_check
      _
    $region3: #{tpu_custom_call.1} parent=1 // pred_check_branch
      %14 = sbr.rel (0) target = $region5
    $region4: #{tpu_custom_call.1} parent=1 // pred_region
      %s16 = ssub.s32 8192, 8192
      %17 = vsyncadd [#allocation4], %s16
      %s18 = sshll.u32 [#allocation3], 4
      %s19 = int_to_ptr.vmem [resolvable:$true] %s18
      %24 = dma.hbm_to_vmem [thread:$0]  %s0, 8192, %s19, [#allocation4], 256, 256, 16
    $region5: #{tpu_custom_call.1} parent=1 // pred_fallthru
      _
    // Predicated region
    $region6: #{tpu_custom_call.1} parent=1 // pred_check
      _
    $region7: #{tpu_custom_call.1} parent=1 // pred_check_branch
      %26 = sbr.rel (0) target = $region9
    $region8: #{tpu_custom_call.1} parent=1 // pred_region
      _
    $region9: #{tpu_custom_call.1} parent=1 // pred_fallthru
      _
    // Predicated region
    $region10: #{tpu_custom_call.1} parent=1 // pred_check
      _
    $region11: #{tpu_custom_call.1} parent=1 // pred_check_branch
      %28 = sbr.rel (0) target = $region13
    $region12: #{tpu_custom_call.1} parent=1 // pred_region
      _
    $region13: #{tpu_custom_call.1} parent=1 // pred_fallthru
      _
    // Predicated region
    $region14: #{tpu_custom_call.1} parent=1 // pred_check
      _
    $region15: #{tpu_custom_call.1} parent=1 // pred_check_branch
      %30 = sbr.rel (0) target = $region17
    $region16: #{tpu_custom_call.1} parent=1 // pred_region
      %31 = dma.done [#allocation4], 8192
    $region17: #{tpu_custom_call.1} parent=1 // pred_fallthru
      _
    %p32 = scmp.eq.s32.totalorder 0, 0
    // Predicated region
    $region18: #{tpu_custom_call.1} parent=1 // pred_check
      %p33 = pneg %p32
    $region19: #{tpu_custom_call.1} parent=1 // pred_check_branch
      %35 = sbr.rel (%p33) target = $region21
    $region20: #{tpu_custom_call.1} parent=1 // pred_region
      %36 = vst [vmem:[#allocation2] sm:$0x3] 0.0
    $region21: #{tpu_custom_call.1} parent=1 // pred_fallthru
      _
    %v37 = vld [vmem:[#allocation3] sm:$0xff]
    %v38 = vld [vmem:[#allocation3 + $0x10] sm:$0xff]
    %v39 = vld [vmem:[#allocation3 + $0x20] sm:$0xff]
    %v40 = vld [vmem:[#allocation3 + $0x30] sm:$0xff]
    %v41 = vld [vmem:[#allocation3 + $0x40] sm:$0xff]
    %v42 = vld [vmem:[#allocation3 + $0x50] sm:$0xff]
    %v43 = vld [vmem:[#allocation3 + $0x60] sm:$0xff]
    %v44 = vld [vmem:[#allocation3 + $0x70] sm:$0xff]
    %v45 = vld [vmem:[#allocation3 + $0x80] sm:$0xff]
    %v46 = vld [vmem:[#allocation3 + $0x90] sm:$0xff]
    %v47 = vld [vmem:[#allocation3 + $0xa0] sm:$0xff]
    %v48 = vld [vmem:[#allocation3 + $0xb0] sm:$0xff]
    %v49 = vld [vmem:[#allocation3 + $0xc0] sm:$0xff]
    %v50 = vld [vmem:[#allocation3 + $0xd0] sm:$0xff]
    %v51 = vld [vmem:[#allocation3 + $0xe0] sm:$0xff]
    %v52 = vld [vmem:[#allocation3 + $0xf0] sm:$0xff]
    %v53 = vld [vmem:[#allocation3 + $0x100] sm:$0xff]
    %v54 = vld [vmem:[#allocation3 + $0x110] sm:$0xff]
    %v55 = vld [vmem:[#allocation3 + $0x120] sm:$0xff]
    %v56 = vld [vmem:[#allocation3 + $0x130] sm:$0xff]
    %v57 = vld [vmem:[#allocation3 + $0x140] sm:$0xff]
    %v58 = vld [vmem:[#allocation3 + $0x150] sm:$0xff]
    %v59 = vld [vmem:[#allocation3 + $0x160] sm:$0xff]
    %v60 = vld [vmem:[#allocation3 + $0x170] sm:$0xff]
    %v61 = vld [vmem:[#allocation3 + $0x180] sm:$0xff]
    %v62 = vld [vmem:[#allocation3 + $0x190] sm:$0xff]
    %v63 = vld [vmem:[#allocation3 + $0x1a0] sm:$0xff]
    %v64 = vld [vmem:[#allocation3 + $0x1b0] sm:$0xff]
    %v65 = vld [vmem:[#allocation3 + $0x1c0] sm:$0xff]
    %v66 = vld [vmem:[#allocation3 + $0x1d0] sm:$0xff]
    %v67 = vld [vmem:[#allocation3 + $0x1e0] sm:$0xff]
    %v68 = vld [vmem:[#allocation3 + $0x1f0] sm:$0xff]
    %v69 = vld [vmem:[#allocation3 + $0x8] sm:$0xff]
    %v70 = vld [vmem:[#allocation3 + $0x18] sm:$0xff]
    %v71 = vld [vmem:[#allocation3 + $0x28] sm:$0xff]
    %v72 = vld [vmem:[#allocation3 + $0x38] sm:$0xff]
    %v73 = vld [vmem:[#allocation3 + $0x48] sm:$0xff]
    %v74 = vld [vmem:[#allocation3 + $0x58] sm:$0xff]
    %v75 = vld [vmem:[#allocation3 + $0x68] sm:$0xff]
    %v76 = vld [vmem:[#allocation3 + $0x78] sm:$0xff]
    %v77 = vld [vmem:[#allocation3 + $0x88] sm:$0xff]
    %v78 = vld [vmem:[#allocation3 + $0x98] sm:$0xff]
    %v79 = vld [vmem:[#allocation3 + $0xa8] sm:$0xff]
    %v80 = vld [vmem:[#allocation3 + $0xb8] sm:$0xff]
    %v81 = vld [vmem:[#allocation3 + $0xc8] sm:$0xff]
    %v82 = vld [vmem:[#allocation3 + $0xd8] sm:$0xff]
    %v83 = vld [vmem:[#allocation3 + $0xe8] sm:$0xff]
    %v84 = vld [vmem:[#allocation3 + $0xf8] sm:$0xff]
    %v85 = vld [vmem:[#allocation3 + $0x108] sm:$0xff]
    %v86 = vld [vmem:[#allocation3 + $0x118] sm:$0xff]
    %v87 = vld [vmem:[#allocation3 + $0x128] sm:$0xff]
    %v88 = vld [vmem:[#allocation3 + $0x138] sm:$0xff]
    %v89 = vld [vmem:[#allocation3 + $0x148] sm:$0xff]
    %v90 = vld [vmem:[#allocation3 + $0x158] sm:$0xff]
    %v91 = vld [vmem:[#allocation3 + $0x168] sm:$0xff]
    %v92 = vld [vmem:[#allocation3 + $0x178] sm:$0xff]
    %v93 = vld [vmem:[#allocation3 + $0x188] sm:$0xff]
    %v94 = vld [vmem:[#allocation3 + $0x198] sm:$0xff]
    %v95 = vld [vmem:[#allocation3 + $0x1a8] sm:$0xff]
    %v96 = vld [vmem:[#allocation3 + $0x1b8] sm:$0xff]
    %v97 = vld [vmem:[#allocation3 + $0x1c8] sm:$0xff]
    %v98 = vld [vmem:[#allocation3 + $0x1d8] sm:$0xff]
    %v99 = vld [vmem:[#allocation3 + $0x1e8] sm:$0xff]
    %v100 = vld [vmem:[#allocation3 + $0x1f8] sm:$0xff]
    %v101 = vadd.f32 %v37, %v69
    %v102 = vadd.f32 %v38, %v70
    %v103 = vadd.f32 %v39, %v71
    %v104 = vadd.f32 %v40, %v72
    %v105 = vadd.f32 %v41, %v73
    %v106 = vadd.f32 %v42, %v74
    %v107 = vadd.f32 %v43, %v75
    %v108 = vadd.f32 %v44, %v76
    %v109 = vadd.f32 %v45, %v77
    %v110 = vadd.f32 %v46, %v78
    %v111 = vadd.f32 %v47, %v79
    %v112 = vadd.f32 %v48, %v80
    %v113 = vadd.f32 %v49, %v81
    %v114 = vadd.f32 %v50, %v82
    %v115 = vadd.f32 %v51, %v83
    %v116 = vadd.f32 %v52, %v84
    %v117 = vadd.f32 %v53, %v85
    %v118 = vadd.f32 %v54, %v86
    %v119 = vadd.f32 %v55, %v87
    %v120 = vadd.f32 %v56, %v88
    %v121 = vadd.f32 %v57, %v89
    %v122 = vadd.f32 %v58, %v90
    %v123 = vadd.f32 %v59, %v91
    %v124 = vadd.f32 %v60, %v92
    %v125 = vadd.f32 %v61, %v93
    %v126 = vadd.f32 %v62, %v94
    %v127 = vadd.f32 %v63, %v95
    %v128 = vadd.f32 %v64, %v96
    %v129 = vadd.f32 %v65, %v97
    %v130 = vadd.f32 %v66, %v98
    %v131 = vadd.f32 %v67, %v99
    %v132 = vadd.f32 %v68, %v100
    %v133 = vld [vmem:[#allocation2] sm:$0x3]
    %134 = vadd.xlane.f32.xlu0 %v101
    %v135 = vpop.xlane.xlu0 %134
    %136 = vadd.xlane.f32.xlu0 %v102
    %v137 = vpop.xlane.xlu0 %136
    %138 = vadd.xlane.f32.xlu0 %v103
    %v139 = vpop.xlane.xlu0 %138
    %140 = vadd.xlane.f32.xlu0 %v104
    %v141 = vpop.xlane.xlu0 %140
    %142 = vadd.xlane.f32.xlu0 %v105
    %v143 = vpop.xlane.xlu0 %142
    %144 = vadd.xlane.f32.xlu0 %v106
    %v145 = vpop.xlane.xlu0 %144
    %146 = vadd.xlane.f32.xlu0 %v107
    %v147 = vpop.xlane.xlu0 %146
    %148 = vadd.xlane.f32.xlu0 %v108
    %v149 = vpop.xlane.xlu0 %148
    %150 = vadd.xlane.f32.xlu0 %v109
    %v151 = vpop.xlane.xlu0 %150
    %152 = vadd.xlane.f32.xlu0 %v110
    %v153 = vpop.xlane.xlu0 %152
    %154 = vadd.xlane.f32.xlu0 %v111
    %v155 = vpop.xlane.xlu0 %154
    %156 = vadd.xlane.f32.xlu0 %v112
    %v157 = vpop.xlane.xlu0 %156
    %158 = vadd.xlane.f32.xlu0 %v113
    %v159 = vpop.xlane.xlu0 %158
    %160 = vadd.xlane.f32.xlu0 %v114
    %v161 = vpop.xlane.xlu0 %160
    %162 = vadd.xlane.f32.xlu0 %v115
    %v163 = vpop.xlane.xlu0 %162
    %164 = vadd.xlane.f32.xlu0 %v116
    %v165 = vpop.xlane.xlu0 %164
    %166 = vadd.xlane.f32.xlu0 %v117
    %v167 = vpop.xlane.xlu0 %166
    %168 = vadd.xlane.f32.xlu0 %v118
    %v169 = vpop.xlane.xlu0 %168
    %170 = vadd.xlane.f32.xlu0 %v119
    %v171 = vpop.xlane.xlu0 %170
    %172 = vadd.xlane.f32.xlu0 %v120
    %v173 = vpop.xlane.xlu0 %172
    %174 = vadd.xlane.f32.xlu0 %v121
    %v175 = vpop.xlane.xlu0 %174
    %176 = vadd.xlane.f32.xlu0 %v122
    %v177 = vpop.xlane.xlu0 %176
    %178 = vadd.xlane.f32.xlu0 %v123
    %v179 = vpop.xlane.xlu0 %178
    %180 = vadd.xlane.f32.xlu0 %v124
    %v181 = vpop.xlane.xlu0 %180
    %182 = vadd.xlane.f32.xlu0 %v125
    %v183 = vpop.xlane.xlu0 %182
    %184 = vadd.xlane.f32.xlu0 %v126
    %v185 = vpop.xlane.xlu0 %184
    %186 = vadd.xlane.f32.xlu0 %v127
    %v187 = vpop.xlane.xlu0 %186
    %188 = vadd.xlane.f32.xlu0 %v128
    %v189 = vpop.xlane.xlu0 %188
    %190 = vadd.xlane.f32.xlu0 %v129
    %v191 = vpop.xlane.xlu0 %190
    %192 = vadd.xlane.f32.xlu0 %v130
    %v193 = vpop.xlane.xlu0 %192
    %194 = vadd.xlane.f32.xlu0 %v131
    %v195 = vpop.xlane.xlu0 %194
    %196 = vadd.xlane.f32.xlu0 %v132
    %v197 = vpop.xlane.xlu0 %196
    %v230 = vlaneseq
    %v231 = vand.u32 %v230, 127
    %v232 = vlaneseq
    %v233 = vshrl.u32 %v232, 7
    %v234 = vsub.s32 %v231, %v233
    %v235 = vrot.slane %v135, %v234
    %v236 = vadd.s32 %v231, 4294967288
    %v237 = vlaneseq
    %v238 = vshrl.u32 %v237, 7
    %v239 = vsub.s32 %v236, %v238
    %v240 = vrot.slane %v137, %v239
    %vm241 = vcmask 130112
    %v242 = vsel %vm241, %v240, %v235
    %v243 = vadd.s32 %v231, 4294967280
    %v244 = vlaneseq
    %v245 = vshrl.u32 %v244, 7
    %v246 = vsub.s32 %v243, %v245
    %v247 = vrot.slane %v139, %v246
    %vm248 = vcmask 195712
    %v249 = vsel %vm248, %v247, %v242
    %v250 = vadd.s32 %v231, 4294967272
    %v251 = vlaneseq
    %v252 = vshrl.u32 %v251, 7
    %v253 = vsub.s32 %v250, %v252
    %v254 = vrot.slane %v141, %v253
    %vm255 = vcmask 261312
    %v256 = vsel %vm255, %v254, %v249
    %v257 = vadd.s32 %v231, 4294967264
    %v258 = vlaneseq
    %v259 = vshrl.u32 %v258, 7
    %v260 = vsub.s32 %v257, %v259
    %v261 = vrot.slane %v143, %v260
    %vm262 = vcmask 326912
    %v263 = vsel %vm262, %v261, %v256
    %v264 = vadd.s32 %v231, 4294967256
    %v265 = vlaneseq
    %v266 = vshrl.u32 %v265, 7
    %v267 = vsub.s32 %v264, %v266
    %v268 = vrot.slane %v145, %v267
    %vm269 = vcmask 392512
    %v270 = vsel %vm269, %v268, %v263
    %v271 = vadd.s32 %v231, 4294967248
    %v272 = vlaneseq
    %v273 = vshrl.u32 %v272, 7
    %v274 = vsub.s32 %v271, %v273
    %v275 = vrot.slane %v147, %v274
    %vm276 = vcmask 458112
    %v277 = vsel %vm276, %v275, %v270
    %v278 = vadd.s32 %v231, 4294967240
    %v279 = vlaneseq
    %v280 = vshrl.u32 %v279, 7
    %v281 = vsub.s32 %v278, %v280
    %v282 = vrot.slane %v149, %v281
    %vm283 = vcmask 523712
    %v284 = vsel %vm283, %v282, %v277
    %v285 = vadd.s32 %v231, 4294967232
    %v286 = vlaneseq
    %v287 = vshrl.u32 %v286, 7
    %v288 = vsub.s32 %v285, %v287
    %v289 = vrot.slane %v151, %v288
    %vm290 = vcmask 589312
    %v291 = vsel %vm290, %v289, %v284
    %v292 = vadd.s32 %v231, 4294967224
    %v293 = vlaneseq
    %v294 = vshrl.u32 %v293, 7
    %v295 = vsub.s32 %v292, %v294
    %v296 = vrot.slane %v153, %v295
    %vm297 = vcmask 654912
    %v298 = vsel %vm297, %v296, %v291
    %v299 = vadd.s32 %v231, 4294967216
    %v300 = vlaneseq
    %v301 = vshrl.u32 %v300, 7
    %v302 = vsub.s32 %v299, %v301
    %v303 = vrot.slane %v155, %v302
    %vm304 = vcmask 720512
    %v305 = vsel %vm304, %v303, %v298
    %v306 = vadd.s32 %v231, 4294967208
    %v307 = vlaneseq
    %v308 = vshrl.u32 %v307, 7
    %v309 = vsub.s32 %v306, %v308
    %v310 = vrot.slane %v157, %v309
    %vm311 = vcmask 786112
    %v312 = vsel %vm311, %v310, %v305
    %v313 = vadd.s32 %v231, 4294967200
    %v314 = vlaneseq
    %v315 = vshrl.u32 %v314, 7
    %v316 = vsub.s32 %v313, %v315
    %v317 = vrot.slane %v159, %v316
    %vm318 = vcmask 851712
    %v319 = vsel %vm318, %v317, %v312
    %v320 = vadd.s32 %v231, 4294967192
    %v321 = vlaneseq
    %v322 = vshrl.u32 %v321, 7
    %v323 = vsub.s32 %v320, %v322
    %v324 = vrot.slane %v161, %v323
    %vm325 = vcmask 917312
    %v326 = vsel %vm325, %v324, %v319
    %v327 = vadd.s32 %v231, 4294967184
    %v328 = vlaneseq
    %v329 = vshrl.u32 %v328, 7
    %v330 = vsub.s32 %v327, %v329
    %v331 = vrot.slane %v163, %v330
    %vm332 = vcmask 982912
    %v333 = vsel %vm332, %v331, %v326
    %v334 = vadd.s32 %v231, 4294967176
    %v335 = vlaneseq
    %v336 = vshrl.u32 %v335, 7
    %v337 = vsub.s32 %v334, %v336
    %v338 = vrot.slane %v165, %v337
    %vm339 = vcmask 1048512
    %v340 = vsel %vm339, %v338, %v333
    %v341 = vlaneseq
    %v342 = vshrl.u32 %v341, 7
    %v343 = vsub.s32 %v231, %v342
    %v344 = vrot.slane %v167, %v343
    %v345 = vlaneseq
    %v346 = vshrl.u32 %v345, 7
    %v347 = vsub.s32 %v236, %v346
    %v348 = vrot.slane %v169, %v347
    %v349 = vsel %vm241, %v348, %v344
    %v350 = vlaneseq
    %v351 = vshrl.u32 %v350, 7
    %v352 = vsub.s32 %v243, %v351
    %v353 = vrot.slane %v171, %v352
    %v354 = vsel %vm248, %v353, %v349
    %v355 = vlaneseq
    %v356 = vshrl.u32 %v355, 7
    %v357 = vsub.s32 %v250, %v356
    %v358 = vrot.slane %v173, %v357
    %v359 = vsel %vm255, %v358, %v354
    %v360 = vlaneseq
    %v361 = vshrl.u32 %v360, 7
    %v362 = vsub.s32 %v257, %v361
    %v363 = vrot.slane %v175, %v362
    %v364 = vsel %vm262, %v363, %v359
    %v365 = vlaneseq
    %v366 = vshrl.u32 %v365, 7
    %v367 = vsub.s32 %v264, %v366
    %v368 = vrot.slane %v177, %v367
    %v369 = vsel %vm269, %v368, %v364
    %v370 = vlaneseq
    %v371 = vshrl.u32 %v370, 7
    %v372 = vsub.s32 %v271, %v371
    %v373 = vrot.slane %v179, %v372
    %v374 = vsel %vm276, %v373, %v369
    %v375 = vlaneseq
    %v376 = vshrl.u32 %v375, 7
    %v377 = vsub.s32 %v278, %v376
    %v378 = vrot.slane %v181, %v377
    %v379 = vsel %vm283, %v378, %v374
    %v380 = vlaneseq
    %v381 = vshrl.u32 %v380, 7
    %v382 = vsub.s32 %v285, %v381
    %v383 = vrot.slane %v183, %v382
    %v384 = vsel %vm290, %v383, %v379
    %v385 = vlaneseq
    %v386 = vshrl.u32 %v385, 7
    %v387 = vsub.s32 %v292, %v386
    %v388 = vrot.slane %v185, %v387
    %v389 = vsel %vm297, %v388, %v384
    %v390 = vlaneseq
    %v391 = vshrl.u32 %v390, 7
    %v392 = vsub.s32 %v299, %v391
    %v393 = vrot.slane %v187, %v392
    %v394 = vsel %vm304, %v393, %v389
    %v395 = vlaneseq
    %v396 = vshrl.u32 %v395, 7
    %v397 = vsub.s32 %v306, %v396
    %v398 = vrot.slane %v189, %v397
    %v399 = vsel %vm311, %v398, %v394
    %v400 = vlaneseq
    %v401 = vshrl.u32 %v400, 7
    %v402 = vsub.s32 %v313, %v401
    %v403 = vrot.slane %v191, %v402
    %v404 = vsel %vm318, %v403, %v399
    %v405 = vlaneseq
    %v406 = vshrl.u32 %v405, 7
    %v407 = vsub.s32 %v320, %v406
    %v408 = vrot.slane %v193, %v407
    %v409 = vsel %vm325, %v408, %v404
    %v410 = vlaneseq
    %v411 = vshrl.u32 %v410, 7
    %v412 = vsub.s32 %v327, %v411
    %v413 = vrot.slane %v195, %v412
    %v414 = vsel %vm332, %v413, %v409
    %v415 = vlaneseq
    %v416 = vshrl.u32 %v415, 7
    %v417 = vsub.s32 %v334, %v416
    %v418 = vrot.slane %v197, %v417
    %v419 = vsel %vm339, %v418, %v414
    %vm420 = vcmask 1041409
    %v421 = vsel %vm420, %v419, %v340
    %v423 = vadd.f32 %v133, %v421
    %424 = vst [vmem:[#allocation2] sm:$0x3] %v423
    // Predicated region
    $region22: #{tpu_custom_call.1} parent=1 // pred_check
      %p425 = pneg %p32
    $region23: #{tpu_custom_call.1} parent=1 // pred_check_branch
      %427 = sbr.rel (%p425) target = $region25
    $region24: #{tpu_custom_call.1} parent=1 // pred_region
      %v428 = vld [vmem:[#allocation2] sm:$0x3]
      %v429 = vmul.f32 %v428, 0.00390625
      %430 = vst [vmem:[#allocation6] sm:$0x3] %v429
      %v431 = vld [vmem:[%s1] sm:$0x1]
      %v433 = vlaneseq
      %v434 = vshrl.u32 %v433, 7
      %v435 = vsub.s32 0, %v434
      %v436 = vrot.slane %v431, %v435
      %v438 = vmul.f32 %v429, %v436
      %v439 = vld [vmem:[%s2] sm:$0x1]
      %v441 = vlaneseq
      %v442 = vshrl.u32 %v441, 7
      %v443 = vsub.s32 0, %v442
      %v444 = vrot.slane %v439, %v443
      %v446 = vadd.f32 %v438, %v444
      %447 = vst [vmem:[#allocation7] sm:$0x3] %v446
    $region25: #{tpu_custom_call.1} parent=1 // pred_fallthru
      _
    // Predicated region
    $region26: #{tpu_custom_call.1} parent=1 // pred_check
      _
    $region27: #{tpu_custom_call.1} parent=1 // pred_check_branch
      %449 = sbr.rel (0) target = $region29
    $region28: #{tpu_custom_call.1} parent=1 // pred_region
      %s451 = ssub.s32 32, 32
      %452 = vsyncadd [#allocation5], %s451
      %s454 = sshll.u32 [#allocation6], 4
      %s455 = int_to_ptr.vmem [resolvable:$true] %s454
      %457 = dma.vmem_to_hbm [thread:$0]  %s455, 32, %s3, [#allocation5]
    $region29: #{tpu_custom_call.1} parent=1 // pred_fallthru
      _
    // Predicated region
    $region30: #{tpu_custom_call.1} parent=1 // pred_check
      _
    $region31: #{tpu_custom_call.1} parent=1 // pred_check_branch
      %459 = sbr.rel (0) target = $region33
    $region32: #{tpu_custom_call.1} parent=1 // pred_region
      %s461 = ssub.s32 32, 32
      %462 = vsyncadd [#allocation8], %s461
      %s464 = sshll.u32 [#allocation7], 4
      %s465 = int_to_ptr.vmem [resolvable:$true] %s464
      %467 = dma.vmem_to_hbm [thread:$0]  %s465, 32, %s4, [#allocation8]
    $region33: #{tpu_custom_call.1} parent=1 // pred_fallthru
      _
    // Predicated region
    $region34: #{tpu_custom_call.1} parent=1 // pred_check
      _
    $region35: #{tpu_custom_call.1} parent=1 // pred_check_branch
      %469 = sbr.rel (0) target = $region37
    $region36: #{tpu_custom_call.1} parent=1 // pred_region
      %470 = dma.done [#allocation5], 32
    $region37: #{tpu_custom_call.1} parent=1 // pred_fallthru
      _
    // Predicated region
    $region38: #{tpu_custom_call.1} parent=1 // pred_check
      _
    $region39: #{tpu_custom_call.1} parent=1 // pred_check_branch
      %472 = sbr.rel (0) target = $region41
    $region40: #{tpu_custom_call.1} parent=1 // pred_region
      %473 = dma.done [#allocation8], 32
    $region41: #{tpu_custom_call.1} parent=1 // pred_fallthru
      _
    %474 = vsyncpa [#allocation4], 1
    %475 = vsyncpa [#allocation5], 1
    %476 = vsyncpa [#allocation8], 1

</llo_original>
